<compile_context>
chip_gen: v7x
topology: tpu7x:2x2x1
jax: 0.10.0
libtpu: 0.0.40
codegen_flags: <defaults>
</compile_context>

<pallas_src>
import jax
import jax.numpy as jnp
from jax.experimental import pallas as pl
from jax.experimental.pallas import tpu as pltpu


# ----------------------------------------------------------------------------
# Kernel
# ----------------------------------------------------------------------------
def ffn_kernel(x_ref, w1t_ref, b1_ref, w2t_ref, b2_ref, o_ref):
    # x tile: (bn, ed, T) — channels on sublanes, spatial on lanes (T % 128 == 0).
    w1t = w1t_ref[...]            # (hdim, ed)  bf16
    b1 = b1_ref[...]              # (hdim, 1)   f32
    w2t = w2t_ref[...]            # (ed, hdim)  bf16
    b2 = b2_ref[...]              # (ed, 1)     f32
    bn = x_ref.shape[0]
    for b in range(bn):           # static unroll over the (small) batch block
        x = x_ref[b]              # (ed, T)
        if x.dtype != jnp.bfloat16:
            x = x.astype(jnp.bfloat16)        # cheap VPU cast (skipped if bf16 input)
        # bf16 x bf16 MXU matmuls, f32 accumulation; bias + ReLU stay in f32.
        h = jnp.dot(w1t, x, preferred_element_type=jnp.float32)        # (hdim, T)
        h = jnp.maximum(h + b1, 0.0)
        y = jnp.dot(w2t, h.astype(jnp.bfloat16),
                    preferred_element_type=jnp.float32)                # (ed, T)
        o_ref[b] = (y + b2).astype(o_ref.dtype)


# ----------------------------------------------------------------------------
# Tiling / VMEM heuristics
# ----------------------------------------------------------------------------
def _round_up(x, m):
    return (x + m - 1) // m * m


def _vmem_capacity_bytes():
    try:
        return int(pltpu.get_tpu_info().vmem_capacity_bytes)
    except Exception:
        return 64 * 2 ** 20        # conservative: v7x per-TensorCore VMEM


def _vmem_footprint(bn, t, ed, hdim, in_item, out_item):
    act = bn * ed * t * (3 * in_item + 2 * out_item)      # x (3-buffered) + out (2-buffered)
    wts = 2 * (2 * hdim * ed * 2 + (hdim + ed) * 4)       # bf16 weights + f32 biases (worst case 2-buf)
    interm = 2 * hdim * t * 4                             # f32 hidden scratch
    return act + wts + interm


def _choose_tiles(N, HW, ed, hdim, in_item, out_item, vmem_budget,
                  max_cols=2048, max_bn=8):
    """Pick (tile_bn, tile_hw): a big lane tile, batch-blocking small maps."""
    tile_hw = min(_round_up(HW, 128), _round_up(max_cols, 128))
    tile_bn = 1
    if tile_hw < max_cols:
        # Small feature map: carry several images per grid step so bytes/step
        # stay large enough to amortize per-step overhead.
        tile_bn = max(1, min(N, max_bn, max_cols // tile_hw))

    while _vmem_footprint(tile_bn, tile_hw, ed, hdim, in_item, out_item) > vmem_budget:
        if tile_bn > 1:
            tile_bn //= 2
        elif tile_hw > 128:
            tile_hw = max(128, _round_up(tile_hw // 2, 128))
        else:
            break
    return tile_bn, tile_hw


# ----------------------------------------------------------------------------
# pallas_call wrapper
# ----------------------------------------------------------------------------
_PIPELINE_HINTS_OK = [None]    # cache: does this jax build accept pipeline_mode?


def ffn_pallas(x_flat, w1t, b1, w2t, b2, *, tile_bn, tile_hw, out_dtype,
               vmem_limit_bytes, cost_estimate):
    """x_flat: (N, ed, HW); w1t: (hdim, ed) bf16; w2t: (ed, hdim) bf16."""
    N, ed, HW = x_flat.shape
    hdim = w1t.shape[0]
    grid = (pl.cdiv(N, tile_bn), pl.cdiv(HW, tile_hw))   # ragged tails -> masked partial blocks

    def build(use_hints):
        def spec(shape, index_map, mode=None):
            if use_hints and mode is not None:
                return pl.BlockSpec(shape, index_map, pipeline_mode=mode)
            return pl.BlockSpec(shape, index_map)

        in_specs = [
            spec((tile_bn, ed, tile_hw), lambda n, j: (n, 0, j), pl.Buffered(3)),  # x
            spec((hdim, ed), lambda n, j: (0, 0), pl.Buffered(1)),                 # W1^T
            spec((hdim, 1), lambda n, j: (0, 0), pl.Buffered(1)),                  # b1
            spec((ed, hdim), lambda n, j: (0, 0), pl.Buffered(1)),                 # W2^T
            spec((ed, 1), lambda n, j: (0, 0), pl.Buffered(1)),                    # b2
        ]
        out_spec = spec((tile_bn, ed, tile_hw), lambda n, j: (n, 0, j))
        return pl.pallas_call(
            ffn_kernel,
            out_shape=jax.ShapeDtypeStruct((N, ed, HW), out_dtype),
            grid_spec=pltpu.PrefetchScalarGridSpec(
                num_scalar_prefetch=0,
                grid=grid,
                in_specs=in_specs,
                out_specs=out_spec,
            ),
            compiler_params=pltpu.CompilerParams(
                dimension_semantics=("parallel", "parallel"),
                vmem_limit_bytes=vmem_limit_bytes,
            ),
            cost_estimate=cost_estimate,
        )

    args = (x_flat, w1t, b1, w2t, b2)
    if _PIPELINE_HINTS_OK[0] is not False:
        try:
            out = build(True)(*args)
            _PIPELINE_HINTS_OK[0] = True
            return out
        except Exception:
            # pipeline_mode / Buffered not supported by this build — fall back.
            _PIPELINE_HINTS_OK[0] = False
    return build(False)(*args)


# ----------------------------------------------------------------------------
# BN folding + forward
# ----------------------------------------------------------------------------
def fuse_conv_bn_t(conv_w, gamma, beta, mean, var, eps=1e-5):
    """Fold 1x1 Conv2d (no bias) + inference BatchNorm2d into (W^T bf16, b f32).

    conv_w: (out, in) from the (out, in, 1, 1) PyTorch weight.
    Returns W^T (out, in) bf16 and b (out, 1) f32 so that y = W^T @ x + b for
    x of shape (in, pixels).
    """
    scale = gamma / jnp.sqrt(var + eps)                           # (out,)
    w_t = (conv_w * scale[:, None]).astype(jnp.bfloat16)          # (out, in)
    b_col = (beta - mean * scale)[:, None].astype(jnp.float32)    # (out, 1)
    return w_t, b_col


def ffn_forward(x_nchw, params, *, out_dtype=None, max_cols=2048, max_bn=8):
    N, C, H, W = x_nchw.shape
    HW = H * W
    out_dtype = jnp.dtype(out_dtype if out_dtype is not None else x_nchw.dtype)

    w1t, b1 = fuse_conv_bn_t(params["pw1_w"], params["bn1_g"], params["bn1_b"],
                             params["bn1_m"], params["bn1_v"])
    w2t, b2 = fuse_conv_bn_t(params["pw2_w"], params["bn2_g"], params["bn2_b"],
                             params["bn2_m"], params["bn2_v"])
    hdim = w1t.shape[0]

    # NCHW -> (N, C, HW): a pure reshape — no transpose, no padding copy.
    x_flat = x_nchw.reshape(N, C, HW)

    in_item = jnp.dtype(x_nchw.dtype).itemsize
    out_item = out_dtype.itemsize
    vmem_cap = _vmem_capacity_bytes()
    tile_bn, tile_hw = _choose_tiles(N, HW, C, hdim, in_item, out_item,
                                     vmem_budget=vmem_cap // 2,
                                     max_cols=max_cols, max_bn=max_bn)

    fp = _vmem_footprint(tile_bn, tile_hw, C, hdim, in_item, out_item)
    vmem_limit = int(min(vmem_cap * 3 // 4, max(32 * 2 ** 20, 2 * fp)))

    cost = pl.CostEstimate(
        flops=4 * C * hdim * N * HW,
        transcendentals=0,
        bytes_accessed=N * C * HW * (in_item + out_item)
                       + 2 * 2 * hdim * C + 4 * (hdim + C),
    )

    y_flat = ffn_pallas(x_flat, w1t, b1, w2t, b2,
                        tile_bn=tile_bn, tile_hw=tile_hw, out_dtype=out_dtype,
                        vmem_limit_bytes=vmem_limit, cost_estimate=cost)
    return y_flat.reshape(N, C, H, W)


def ffn_reference(x_nchw, params):
    """Pure-JAX f32 reference (same fused math, no bf16)."""
    N, C, H, W = x_nchw.shape

    def fuse(conv_w, gamma, beta, mean, var, eps=1e-5):
        scale = gamma / jnp.sqrt(var + eps)
        return (conv_w * scale[:, None]).T, (beta - mean * scale)[None, :]

    w1, b1 = fuse(params["pw1_w"], params["bn1_g"], params["bn1_b"],
                  params["bn1_m"], params["bn1_v"])
    w2, b2 = fuse(params["pw2_w"], params["bn2_g"], params["bn2_b"],
                  params["bn2_m"], params["bn2_v"])
    x_rows = jnp.transpose(x_nchw, (0, 2, 3, 1)).reshape(N * H * W, C)
    h = jnp.maximum(x_rows @ w1 + b1, 0.0)
    y = h @ w2 + b2
    return jnp.transpose(y.reshape(N, H, W, C), (0, 3, 1, 2))


# ----------------------------------------------------------------------------
# Self-test
# ----------------------------------------------------------------------------
def _make_params(key, ed, hdim):
    ks = jax.random.split(key, 10)
    return {
        "pw1_w": jax.random.normal(ks[0], (hdim, ed), jnp.float32) * 0.5,
        "bn1_g": jax.random.normal(ks[1], (hdim,), jnp.float32) * 0.1 + 1.0,
        "bn1_b": jax.random.normal(ks[2], (hdim,), jnp.float32) * 0.1,
        "bn1_m": jax.random.normal(ks[3], (hdim,), jnp.float32) * 0.1,
        "bn1_v": jnp.abs(jax.random.normal(ks[4], (hdim,), jnp.float32)) + 0.5,
        "pw2_w": jax.random.normal(ks[5], (ed, hdim), jnp.float32) * 0.5,
        "bn2_g": jax.random.normal(ks[6], (ed,), jnp.float32) * 0.1 + 1.0,
        "bn2_b": jax.random.normal(ks[7], (ed,), jnp.float32) * 0.1,
        "bn2_m": jax.random.normal(ks[8], (ed,), jnp.float32) * 0.1,
        "bn2_v": jnp.abs(jax.random.normal(ks[9], (ed,), jnp.float32)) + 0.5,
    }


if __name__ == "__main__":
    # --- Test 1: f32 activations, aligned spatial (HW = 256) -----------------
    ed1, hd1 = 4, 8
    params1 = _make_params(jax.random.PRNGKey(0), ed1, hd1)
    x1 = jax.random.normal(jax.random.PRNGKey(1), (2, ed1, 16, 16), jnp.float32)
    y1 = jax.block_until_ready(ffn_forward(x1, params1))
    y1_ref = ffn_reference(x1, params1)
    assert y1.shape == x1.shape and y1.dtype == x1.dtype
    # bf16 MXU inputs vs. f32 reference -> loosened tolerance (expected).
    assert jnp.allclose(y1, y1_ref, atol=2e-2, rtol=2e-2), "mismatch (test 1)"

    # --- Test 2: ragged spatial (7x7 -> HW=49), batch-blocked grid, f32 ------
    ed2, hd2 = 8, 16
    params2 = _make_params(jax.random.PRNGKey(2), ed2, hd2)
    x2 = jax.random.normal(jax.random.PRNGKey(3), (3, ed2, 7, 7), jnp.float32)
    y2 = jax.block_until_ready(ffn_forward(x2, params2))
    y2_ref = ffn_reference(x2, params2)
    assert y2.shape == x2.shape
    assert jnp.allclose(y2, y2_ref, atol=5e-2, rtol=5e-2), "mismatch (test 2)"

    # --- Test 3: bf16 activations end-to-end (fast HBM path) -----------------
    x3 = x2.astype(jnp.bfloat16)
    y3 = jax.block_until_ready(ffn_forward(x3, params2))
    assert y3.dtype == jnp.bfloat16 and y3.shape == x3.shape
    assert bool(jnp.all(jnp.isfinite(y3.astype(jnp.float32))))
    y3_ref = ffn_reference(x3.astype(jnp.float32), params2)
    # bf16 in/out + bf16 weights vs. f32 reference -> loose tolerance.
    assert jnp.allclose(y3.astype(jnp.float32), y3_ref, atol=2e-1, rtol=1e-1), \
        "mismatch (test 3, bf16)"

    print("KERNEL_OK")
</pallas_src>

<mosaic_0001>
module attributes {stable_mosaic.version = 11 : i64} {
  func.func @ffn_kernel(%arg0: i32, %arg1: i32, %arg2: memref<2x4x256xf32, #tpu.memory_space<vmem>>, %arg3: memref<8x4xbf16, #tpu.memory_space<vmem>>, %arg4: memref<8x1xf32, #tpu.memory_space<vmem>>, %arg5: memref<4x8xbf16, #tpu.memory_space<vmem>>, %arg6: memref<4x1xf32, #tpu.memory_space<vmem>>, %arg7: memref<2x4x256xf32, #tpu.memory_space<vmem>>) attributes {dimension_semantics = [#tpu.dimension_semantics<parallel>, #tpu.dimension_semantics<parallel>], iteration_bounds = array<i64: 1, 1>, scalar_prefetch = 0 : i64, scratch_operands = 0 : i64, tpu.core_type = #tpu.core_type<tc>, window_params = [{transform_indices = @transform_0, window_bounds = array<i64: 2, 4, 256>}, {pipeline_mode = #tpu.pipeline_mode<synchronous>, transform_indices = @transform_1, window_bounds = array<i64: 8, 4>}, {pipeline_mode = #tpu.pipeline_mode<synchronous>, transform_indices = @transform_2, window_bounds = array<i64: 8, 1>}, {pipeline_mode = #tpu.pipeline_mode<synchronous>, transform_indices = @transform_3, window_bounds = array<i64: 4, 8>}, {pipeline_mode = #tpu.pipeline_mode<synchronous>, transform_indices = @transform_4, window_bounds = array<i64: 4, 1>}, {transform_indices = @transform_5, window_bounds = array<i64: 2, 4, 256>}]} {
    %c0 = arith.constant 0 : index
    %c0_0 = arith.constant 0 : index
    %0 = vector.load %arg3[%c0, %c0_0] : memref<8x4xbf16, #tpu.memory_space<vmem>>, vector<8x4xbf16>
    %c0_1 = arith.constant 0 : index
    %c0_2 = arith.constant 0 : index
    %1 = vector.load %arg4[%c0_1, %c0_2] : memref<8x1xf32, #tpu.memory_space<vmem>>, vector<8x1xf32>
    %c0_3 = arith.constant 0 : index
    %c0_4 = arith.constant 0 : index
    %2 = vector.load %arg5[%c0_3, %c0_4] : memref<4x8xbf16, #tpu.memory_space<vmem>>, vector<4x8xbf16>
    %c0_5 = arith.constant 0 : index
    %c0_6 = arith.constant 0 : index
    %3 = vector.load %arg6[%c0_5, %c0_6] : memref<4x1xf32, #tpu.memory_space<vmem>>, vector<4x1xf32>
    %c0_7 = arith.constant 0 : index
    %c0_8 = arith.constant 0 : index
    %c0_9 = arith.constant 0 : index
    %4 = vector.load %arg2[%c0_7, %c0_8, %c0_9] : memref<2x4x256xf32, #tpu.memory_space<vmem>>, vector<1x4x256xf32>
    %5 = vector.shape_cast %4 : vector<1x4x256xf32> to vector<4x256xf32>
    %6 = arith.truncf %5 : vector<4x256xf32> to vector<4x256xbf16>
    %cst = arith.constant dense<0.000000e+00> : vector<8x256xf32>
    %7 = tpu.matmul %0, %6, %cst {dimension_numbers = #tpu.dot_dimension_numbers<[1], [0], [0], [1], [0, 0, 1, 1], [], []>} : vector<8x4xbf16>, vector<4x256xbf16>, vector<8x256xf32> -> vector<8x256xf32>
    %8 = vector.broadcast %1 : vector<8x1xf32> to vector<8x256xf32>
    %9 = arith.addf %7, %8 : vector<8x256xf32>
    %cst_10 = arith.constant 0.000000e+00 : f32
    %10 = vector.broadcast %cst_10 : f32 to vector<8x256xf32>
    %11 = arith.maximumf %9, %10 : vector<8x256xf32>
    %12 = arith.truncf %11 : vector<8x256xf32> to vector<8x256xbf16>
    %cst_11 = arith.constant dense<0.000000e+00> : vector<4x256xf32>
    %13 = tpu.matmul %2, %12, %cst_11 {dimension_numbers = #tpu.dot_dimension_numbers<[1], [0], [0], [1], [0, 0, 1, 1], [], []>} : vector<4x8xbf16>, vector<8x256xbf16>, vector<4x256xf32> -> vector<4x256xf32>
    %14 = vector.broadcast %3 : vector<4x1xf32> to vector<4x256xf32>
    %15 = arith.addf %13, %14 : vector<4x256xf32>
    %c0_12 = arith.constant 0 : index
    %c0_13 = arith.constant 0 : index
    %c0_14 = arith.constant 0 : index
    %16 = vector.load %arg7[%c0_12, %c0_13, %c0_14] : memref<2x4x256xf32, #tpu.memory_space<vmem>>, vector<1x4x256xf32>
    %17 = vector.shape_cast %16 : vector<1x4x256xf32> to vector<4x256xf32>
    %18 = vector.shape_cast %15 : vector<4x256xf32> to vector<1x4x256xf32>
    tpu.vector_store %arg7[%c0_12, %c0_13, %c0_14], %18 {strides = array<i32>} : memref<2x4x256xf32, #tpu.memory_space<vmem>>, vector<1x4x256xf32>,
    %c1 = arith.constant 1 : index
    %c0_15 = arith.constant 0 : index
    %c0_16 = arith.constant 0 : index
    %19 = vector.load %arg2[%c1, %c0_15, %c0_16] : memref<2x4x256xf32, #tpu.memory_space<vmem>>, vector<1x4x256xf32>
    %20 = vector.shape_cast %19 : vector<1x4x256xf32> to vector<4x256xf32>
    %21 = arith.truncf %20 : vector<4x256xf32> to vector<4x256xbf16>
    %cst_17 = arith.constant dense<0.000000e+00> : vector<8x256xf32>
    %22 = tpu.matmul %0, %21, %cst_17 {dimension_numbers = #tpu.dot_dimension_numbers<[1], [0], [0], [1], [0, 0, 1, 1], [], []>} : vector<8x4xbf16>, vector<4x256xbf16>, vector<8x256xf32> -> vector<8x256xf32>
    %23 = vector.broadcast %1 : vector<8x1xf32> to vector<8x256xf32>
    %24 = arith.addf %22, %23 : vector<8x256xf32>
    %cst_18 = arith.constant 0.000000e+00 : f32
    %25 = vector.broadcast %cst_18 : f32 to vector<8x256xf32>
    %26 = arith.maximumf %24, %25 : vector<8x256xf32>
    %27 = arith.truncf %26 : vector<8x256xf32> to vector<8x256xbf16>
    %cst_19 = arith.constant dense<0.000000e+00> : vector<4x256xf32>
    %28 = tpu.matmul %2, %27, %cst_19 {dimension_numbers = #tpu.dot_dimension_numbers<[1], [0], [0], [1], [0, 0, 1, 1], [], []>} : vector<4x8xbf16>, vector<8x256xbf16>, vector<4x256xf32> -> vector<4x256xf32>
    %29 = vector.broadcast %3 : vector<4x1xf32> to vector<4x256xf32>
    %30 = arith.addf %28, %29 : vector<4x256xf32>
    %c1_20 = arith.constant 1 : index
    %c0_21 = arith.constant 0 : index
    %c0_22 = arith.constant 0 : index
    %31 = vector.load %arg7[%c1_20, %c0_21, %c0_22] : memref<2x4x256xf32, #tpu.memory_space<vmem>>, vector<1x4x256xf32>
    %32 = vector.shape_cast %31 : vector<1x4x256xf32> to vector<4x256xf32>
    %33 = vector.shape_cast %30 : vector<4x256xf32> to vector<1x4x256xf32>
    tpu.vector_store %arg7[%c1_20, %c0_21, %c0_22], %33 {strides = array<i32>} : memref<2x4x256xf32, #tpu.memory_space<vmem>>, vector<1x4x256xf32>,
    return
  }
  func.func @transform_0(%arg0: i32, %arg1: i32) -> (i32, i32, i32) {
    %c0_i32 = arith.constant 0 : i32
    %c0_i32_0 = arith.constant 0 : i32
    return %arg0, %c0_i32, %arg1 : i32, i32, i32
  }
  func.func @transform_1(%arg0: i32, %arg1: i32) -> (i32, i32) {
    %c0_i32 = arith.constant 0 : i32
    %c0_i32_0 = arith.constant 0 : i32
    %c0_i32_1 = arith.constant 0 : i32
    return %c0_i32, %c0_i32_0 : i32, i32
  }
  func.func @transform_2(%arg0: i32, %arg1: i32) -> (i32, i32) {
    %c0_i32 = arith.constant 0 : i32
    %c0_i32_0 = arith.constant 0 : i32
    %c0_i32_1 = arith.constant 0 : i32
    return %c0_i32, %c0_i32_0 : i32, i32
  }
  func.func @transform_3(%arg0: i32, %arg1: i32) -> (i32, i32) {
    %c0_i32 = arith.constant 0 : i32
    %c0_i32_0 = arith.constant 0 : i32
    %c0_i32_1 = arith.constant 0 : i32
    return %c0_i32, %c0_i32_0 : i32, i32
  }
  func.func @transform_4(%arg0: i32, %arg1: i32) -> (i32, i32) {
    %c0_i32 = arith.constant 0 : i32
    %c0_i32_0 = arith.constant 0 : i32
    %c0_i32_1 = arith.constant 0 : i32
    return %c0_i32, %c0_i32_0 : i32, i32
  }
  func.func @transform_5(%arg0: i32, %arg1: i32) -> (i32, i32, i32) {
    %c0_i32 = arith.constant 0 : i32
    %c0_i32_0 = arith.constant 0 : i32
    return %arg0, %c0_i32, %arg1 : i32, i32, i32
  }
}

</mosaic_0001>

<llo_original>
// kernel: tpu_custom_call.1
$region0: #{tpu_custom_call.1}
  #allocation0 [shape = 'u32[]', space=smem, size = 0x4, offset = 0x4, fixed_abs, tag = 'smem constant byte address 0x4 - core index']
  #allocation1 [shape = 'u32[144,128]{1,0:T(1,128)}', space=vmem, size = 0x12000, scoped, tag = 'internal scratch']
  %s0 = inlined_call_operand.vmem [shape: f32[2,4,256], index: 0, kind: input, shape index: {}]
  %s1 = inlined_call_operand.vmem [shape: bf16[8,4], index: 1, kind: input, shape index: {}]
  %s2 = inlined_call_operand.vmem [shape: f32[8,1], index: 2, kind: input, shape index: {}]
  %s3 = inlined_call_operand.vmem [shape: bf16[4,8], index: 3, kind: input, shape index: {}]
  %s4 = inlined_call_operand.vmem [shape: f32[4,1], index: 4, kind: input, shape index: {}]
  %s5 = inlined_call_operand.hbm [shape: f32[2,4,256], index: 5, kind: output, shape index: {}]
  %s6 = sld [smem:[#allocation0]]
  $region30: #{tpu_custom_call.1} parent=0
    _
  %s8 = ssub.s32 1, %s6
  %s9 = scalar_select 0, %s8, %s6
  $region1: #{tpu_custom_call.1} parent=0
    #allocation2 [shape = 'u8[8192]{0}', space=vmem, size = 0x2000, scoped, tag = 'output window, operand 0, single buffered']
    #allocation3 [shape = 's32[1]{0}', space=sflag, size = 0x4, scoped, tag = 'scoped memory for tpu_custom_call.1']
    %10 = vsyncpa [#allocation3], 0
    // Predicated region
    $region2: #{tpu_custom_call.1} parent=1 // pred_check
      _
    $region3: #{tpu_custom_call.1} parent=1 // pred_check_branch
      %12 = sbr.rel (0) target = $region5
    $region4: #{tpu_custom_call.1} parent=1 // pred_region
      _
    $region5: #{tpu_custom_call.1} parent=1 // pred_fallthru
      _
    // Predicated region
    $region6: #{tpu_custom_call.1} parent=1 // pred_check
      _
    $region7: #{tpu_custom_call.1} parent=1 // pred_check_branch
      %14 = sbr.rel (0) target = $region9
    $region8: #{tpu_custom_call.1} parent=1 // pred_region
      _
    $region9: #{tpu_custom_call.1} parent=1 // pred_fallthru
      _
    // Predicated region
    $region10: #{tpu_custom_call.1} parent=1 // pred_check
      _
    $region11: #{tpu_custom_call.1} parent=1 // pred_check_branch
      %16 = sbr.rel (0) target = $region13
    $region12: #{tpu_custom_call.1} parent=1 // pred_region
      _
    $region13: #{tpu_custom_call.1} parent=1 // pred_fallthru
      _
    // Predicated region
    $region14: #{tpu_custom_call.1} parent=1 // pred_check
      _
    $region15: #{tpu_custom_call.1} parent=1 // pred_check_branch
      %18 = sbr.rel (0) target = $region17
    $region16: #{tpu_custom_call.1} parent=1 // pred_region
      _
    $region17: #{tpu_custom_call.1} parent=1 // pred_fallthru
      _
    // Predicated region
    $region18: #{tpu_custom_call.1} parent=1 // pred_check
      _
    $region19: #{tpu_custom_call.1} parent=1 // pred_check_branch
      %20 = sbr.rel (0) target = $region21
    $region20: #{tpu_custom_call.1} parent=1 // pred_region
      _
    $region21: #{tpu_custom_call.1} parent=1 // pred_fallthru
      _
    %v22 = vld [vmem:[%s1] sm:$0xf]
    %v23 = vld [vmem:[%s2] sm:$0xff]
    %v24 = vld [vmem:[%s3] sm:$0x3]
    %v25 = vld [vmem:[%s4] sm:$0xf]
    %v26 = vld [vmem:[%s0] sm:$0xff]
    %v28 = vcombine.high %v26, %v26
    %v30 = vpack.c.bf16 %v26, %v26
    %v31 = vpack.c.bf16 %v28, %v28
    %33 = vset.pattern.permute.xlu0 0
    %34 = vperm.xlu0 %33, %v23
    %v35 = vpop.permute.xlu0 %34
    %vm37 = vcmask 31744
    %v39 = vsel %vm37, %v22, 0
    %vm41 = vcmask 1041408
    %v43 = vsel %vm41, %v30, 0
    %v46 = vsel %vm41, %v31, 0
    %48 = vmatprep.subr.bf16.mxu0 %v46
    %49 = vmatpush1.bf16.msra.mxu0 %v43
    %50 = vmatprep.subr.bf16.mxu0 0
    %51 = vmatpush1.bf16.msra.mxu0 0
    %52 = vmatprep.subr.bf16.mxu0 0
    %53 = vmatpush1.bf16.msra.mxu0 0
    %54 = vmatprep.subr.bf16.mxu0 0
    %55 = vmatpush1.bf16.msra.mxu0 0
    %56 = vmatprep.subr.bf16.mxu0 0
    %57 = vmatpush1.bf16.msra.mxu0 0
    %58 = vmatprep.subr.bf16.mxu0 0
    %59 = vmatpush1.bf16.msra.mxu0 0
    %60 = vmatprep.subr.bf16.mxu0 0
    %61 = vmatpush1.bf16.msra.mxu0 0
    %62 = vmatprep.subr.bf16.mxu0 0
    %63 = vmatpush1.bf16.msra.mxu0 0
    %64 = vmatprep.subr.bf16.mxu0 0
    %65 = vmatpush1.bf16.msra.mxu0 0
    %66 = vmatprep.subr.bf16.mxu0 0
    %67 = vmatpush1.bf16.msra.mxu0 0
    %68 = vmatprep.subr.bf16.mxu0 0
    %69 = vmatpush1.bf16.msra.mxu0 0
    %70 = vmatprep.subr.bf16.mxu0 0
    %71 = vmatpush1.bf16.msra.mxu0 0
    %72 = vmatprep.subr.bf16.mxu0 0
    %73 = vmatpush1.bf16.msra.mxu0 0
    %74 = vmatprep.subr.bf16.mxu0 0
    %75 = vmatpush1.bf16.msra.mxu0 0
    %76 = vmatprep.subr.bf16.mxu0 0
    %77 = vmatpush1.bf16.msra.mxu0 0
    %78 = vmatprep.subr.bf16.mxu0 0
    %79 = vmatpush1.bf16.msra.mxu0 0
    %80 = vmatprep.mubr.bf16.mxu0 0
    %81 = vmatmul.mubr.bf16.gmra.mrb[0].mxu0 %v39
    %v82 = vpop.f32.mrb[0].mxu0
    %v83 = vadd.f32 %v35, %v82
    %v84 = vpop.f32.mrb[0].mxu0
    %v85 = vadd.f32 %v35, %v84
    %v86 = vpop.f32.mrb[0].mxu0
    %v87 = vpop.f32.mrb[0].mxu0
    %88 = vdwg.mxu0
    %v89 = vmax.f32 %v83, 0.0
    %v90 = vmax.f32 %v85, 0.0
    %v91 = vpack.c.bf16 %v89, %v89
    %v92 = vpack.c.bf16 %v90, %v90
    %94 = vset.pattern.permute.xlu0 0
    %95 = vperm.xlu0 %94, %v25
    %v96 = vpop.permute.xlu0 %95
    %vm98 = vcmask 64512
    %v100 = vsel %vm98, %v24, 0
    %vm102 = vcmask 1043456
    %v104 = vsel %vm102, %v91, 0
    %v107 = vsel %vm102, %v92, 0
    %109 = vmatprep.subr.bf16.mxu0 %v107
    %110 = vmatpush1.bf16.msra.mxu0 %v104
    %111 = vmatprep.subr.bf16.mxu0 0
    %112 = vmatpush1.bf16.msra.mxu0 0
    %113 = vmatprep.subr.bf16.mxu0 0
    %114 = vmatpush1.bf16.msra.mxu0 0
    %115 = vmatprep.subr.bf16.mxu0 0
    %116 = vmatpush1.bf16.msra.mxu0 0
    %117 = vmatprep.subr.bf16.mxu0 0
    %118 = vmatpush1.bf16.msra.mxu0 0
    %119 = vmatprep.subr.bf16.mxu0 0
    %120 = vmatpush1.bf16.msra.mxu0 0
    %121 = vmatprep.subr.bf16.mxu0 0
    %122 = vmatpush1.bf16.msra.mxu0 0
    %123 = vmatprep.subr.bf16.mxu0 0
    %124 = vmatpush1.bf16.msra.mxu0 0
    %125 = vmatprep.subr.bf16.mxu0 0
    %126 = vmatpush1.bf16.msra.mxu0 0
    %127 = vmatprep.subr.bf16.mxu0 0
    %128 = vmatpush1.bf16.msra.mxu0 0
    %129 = vmatprep.subr.bf16.mxu0 0
    %130 = vmatpush1.bf16.msra.mxu0 0
    %131 = vmatprep.subr.bf16.mxu0 0
    %132 = vmatpush1.bf16.msra.mxu0 0
    %133 = vmatprep.subr.bf16.mxu0 0
    %134 = vmatpush1.bf16.msra.mxu0 0
    %135 = vmatprep.subr.bf16.mxu0 0
    %136 = vmatpush1.bf16.msra.mxu0 0
    %137 = vmatprep.subr.bf16.mxu0 0
    %138 = vmatpush1.bf16.msra.mxu0 0
    %139 = vmatprep.subr.bf16.mxu0 0
    %140 = vmatpush1.bf16.msra.mxu0 0
    %141 = vmatprep.mubr.bf16.mxu0 0
    %142 = vmatmul.mubr.bf16.gmra.mrb[0].mxu0 %v100
    %v143 = vpop.f32.mrb[0].mxu0
    %v144 = vadd.f32 %v96, %v143
    %v145 = vpop.f32.mrb[0].mxu0
    %v146 = vadd.f32 %v96, %v145
    %v147 = vpop.f32.mrb[0].mxu0
    %v148 = vpop.f32.mrb[0].mxu0
    %149 = vdwg.mxu0
    %v152 = vcombine.low %v144, %v146
    %154 = vst [vmem:[#allocation2] sm:$0xff] %v152
    %s155 = scalar_lea.vmem %s0, 8
    %v156 = vld [vmem:[%s155] sm:$0xff]
    %v158 = vcombine.high %v156, %v156
    %v160 = vpack.c.bf16 %v156, %v156
    %v161 = vpack.c.bf16 %v158, %v158
    %v163 = vsel %vm41, %v160, 0
    %v166 = vsel %vm41, %v161, 0
    %168 = vmatprep.subr.bf16.mxu0 %v166
    %169 = vmatpush1.bf16.msra.mxu0 %v163
    %170 = vmatprep.subr.bf16.mxu0 0
    %171 = vmatpush1.bf16.msra.mxu0 0
    %172 = vmatprep.subr.bf16.mxu0 0
    %173 = vmatpush1.bf16.msra.mxu0 0
    %174 = vmatprep.subr.bf16.mxu0 0
    %175 = vmatpush1.bf16.msra.mxu0 0
    %176 = vmatprep.subr.bf16.mxu0 0
    %177 = vmatpush1.bf16.msra.mxu0 0
    %178 = vmatprep.subr.bf16.mxu0 0
    %179 = vmatpush1.bf16.msra.mxu0 0
    %180 = vmatprep.subr.bf16.mxu0 0
    %181 = vmatpush1.bf16.msra.mxu0 0
    %182 = vmatprep.subr.bf16.mxu0 0
    %183 = vmatpush1.bf16.msra.mxu0 0
    %184 = vmatprep.subr.bf16.mxu0 0
    %185 = vmatpush1.bf16.msra.mxu0 0
    %186 = vmatprep.subr.bf16.mxu0 0
    %187 = vmatpush1.bf16.msra.mxu0 0
    %188 = vmatprep.subr.bf16.mxu0 0
    %189 = vmatpush1.bf16.msra.mxu0 0
    %190 = vmatprep.subr.bf16.mxu0 0
    %191 = vmatpush1.bf16.msra.mxu0 0
    %192 = vmatprep.subr.bf16.mxu0 0
    %193 = vmatpush1.bf16.msra.mxu0 0
    %194 = vmatprep.subr.bf16.mxu0 0
    %195 = vmatpush1.bf16.msra.mxu0 0
    %196 = vmatprep.subr.bf16.mxu0 0
    %197 = vmatpush1.bf16.msra.mxu0 0
    %198 = vmatprep.subr.bf16.mxu0 0
    %199 = vmatpush1.bf16.msra.mxu0 0
    %200 = vmatprep.mubr.bf16.mxu0 0
    %201 = vmatmul.mubr.bf16.gmra.mrb[0].mxu0 %v39
    %v202 = vpop.f32.mrb[0].mxu0
    %v203 = vadd.f32 %v35, %v202
    %v204 = vpop.f32.mrb[0].mxu0
    %v205 = vadd.f32 %v35, %v204
    %v206 = vpop.f32.mrb[0].mxu0
    %v207 = vpop.f32.mrb[0].mxu0
    %208 = vdwg.mxu0
    %v209 = vmax.f32 %v203, 0.0
    %v210 = vmax.f32 %v205, 0.0
    %v211 = vpack.c.bf16 %v209, %v209
    %v212 = vpack.c.bf16 %v210, %v210
    %v214 = vsel %vm102, %v211, 0
    %v217 = vsel %vm102, %v212, 0
    %219 = vmatprep.subr.bf16.mxu0 %v217
    %220 = vmatpush1.bf16.msra.mxu0 %v214
    %221 = vmatprep.subr.bf16.mxu0 0
    %222 = vmatpush1.bf16.msra.mxu0 0
    %223 = vmatprep.subr.bf16.mxu0 0
    %224 = vmatpush1.bf16.msra.mxu0 0
    %225 = vmatprep.subr.bf16.mxu0 0
    %226 = vmatpush1.bf16.msra.mxu0 0
    %227 = vmatprep.subr.bf16.mxu0 0
    %228 = vmatpush1.bf16.msra.mxu0 0
    %229 = vmatprep.subr.bf16.mxu0 0
    %230 = vmatpush1.bf16.msra.mxu0 0
    %231 = vmatprep.subr.bf16.mxu0 0
    %232 = vmatpush1.bf16.msra.mxu0 0
    %233 = vmatprep.subr.bf16.mxu0 0
    %234 = vmatpush1.bf16.msra.mxu0 0
    %235 = vmatprep.subr.bf16.mxu0 0
    %236 = vmatpush1.bf16.msra.mxu0 0
    %237 = vmatprep.subr.bf16.mxu0 0
    %238 = vmatpush1.bf16.msra.mxu0 0
    %239 = vmatprep.subr.bf16.mxu0 0
    %240 = vmatpush1.bf16.msra.mxu0 0
    %241 = vmatprep.subr.bf16.mxu0 0
    %242 = vmatpush1.bf16.msra.mxu0 0
    %243 = vmatprep.subr.bf16.mxu0 0
    %244 = vmatpush1.bf16.msra.mxu0 0
    %245 = vmatprep.subr.bf16.mxu0 0
    %246 = vmatpush1.bf16.msra.mxu0 0
    %247 = vmatprep.subr.bf16.mxu0 0
    %248 = vmatpush1.bf16.msra.mxu0 0
    %249 = vmatprep.subr.bf16.mxu0 0
    %250 = vmatpush1.bf16.msra.mxu0 0
    %251 = vmatprep.mubr.bf16.mxu0 0
    %252 = vmatmul.mubr.bf16.gmra.mrb[0].mxu0 %v100
    %v253 = vpop.f32.mrb[0].mxu0
    %v254 = vadd.f32 %v96, %v253
    %v255 = vpop.f32.mrb[0].mxu0
    %v256 = vadd.f32 %v96, %v255
    %v257 = vpop.f32.mrb[0].mxu0
    %v258 = vpop.f32.mrb[0].mxu0
    %259 = vdwg.mxu0
    %v262 = vcombine.low %v254, %v256
    %s264 = scalar_lea.vmem [#allocation2], 8
    %265 = vst [vmem:[%s264] sm:$0xff] %v262
    // Predicated region
    $region22: #{tpu_custom_call.1} parent=1 // pred_check
      _
    $region23: #{tpu_custom_call.1} parent=1 // pred_check_branch
      %267 = sbr.rel (0) target = $region25
    $region24: #{tpu_custom_call.1} parent=1 // pred_region
      %s269 = ssub.s32 256, 256
      %270 = vsyncadd [#allocation3], %s269
      %s271 = sshll.u32 [#allocation2], 4
      %s272 = int_to_ptr.vmem [resolvable:$true] %s271
      %277 = dma.vmem_to_hbm [thread:$0]  %s272, 256, %s5, [#allocation3], 128, 128, 8
    $region25: #{tpu_custom_call.1} parent=1 // pred_fallthru
      _
    // Predicated region
    $region26: #{tpu_custom_call.1} parent=1 // pred_check
      _
    $region27: #{tpu_custom_call.1} parent=1 // pred_check_branch
      %279 = sbr.rel (0) target = $region29
    $region28: #{tpu_custom_call.1} parent=1 // pred_region
      %280 = dma.done [#allocation3], 256
    $region29: #{tpu_custom_call.1} parent=1 // pred_fallthru
      _
    %281 = vsyncpa [#allocation3], 1

</llo_original>
